<compile_context>
chip_gen: v7x
topology: tpu7x:2x2x1
jax: 0.10.0
libtpu: 0.0.40
codegen_flags: <defaults>
</compile_context>

<pallas_src>
import jax
import jax.numpy as jnp
from jax import lax
from jax.experimental import pallas as pl
from jax.experimental.pallas import tpu as pltpu

STATUS_NUMS = 3
ACTION_NUMS = 1
HIDDEN = 128
CHUNK = 256          # inner sub-chunk (rows): h1/h2 are 32 vregs each (fits file)
GRIDLESS_MAX = 256   # single-shot (no grid) path for tiny batches


def ac_kernel(x_ref, w1_ref, b1_ref, w2_ref, b2_ref, wh_ref, bh_ref, out_ref):
    tb = x_ref.shape[0]
    if tb <= CHUNK:                       # static (trace-time) decision
        chunk, n_chunks = tb, 1
    else:
        assert tb % CHUNK == 0, "grid tile must be a multiple of CHUNK"
        chunk, n_chunks = CHUNK, tb // CHUNK

    # Hoist weight/bias loads out of the chunk loop (they are tiny and shared).
    w1 = w1_ref[...]                      # [3, 128]    f32
    b1 = b1_ref[...]                      # [1, 128]    f32
    w2 = w2_ref[...]                      # [128, 128]  bf16 (or f32)
    b2 = b2_ref[...]                      # [1, 128]    f32
    wh = wh_ref[...]                      # [128, 2]    bf16 (or f32)
    bh = bh_ref[...]                      # [1, 2]      f32
    dot_dtype = w2_ref.dtype              # MXU operand dtype

    def process(r):
        x = x_ref[pl.ds(r, chunk), :]     # [chunk, 3]  f32

        # fc[0] + ReLU: K=3 stays on the VPU (3 FMAs), all f32.
        h1 = (x[:, 0:1] * w1[0:1, :]
              + x[:, 1:2] * w1[1:2, :]
              + x[:, 2:3] * w1[2:3, :]
              + b1)
        h1 = jnp.maximum(h1, 0.0)         # [chunk, 128] f32

        # fc[2] + ReLU: bf16 operands on the MXU, f32 accumulate.
        h2 = jnp.dot(h1.astype(dot_dtype), w2,
                     preferred_element_type=jnp.float32) + b2
        h2 = jnp.maximum(h2, 0.0)         # [chunk, 128] f32, non-negative

        # Fused actor/critic heads: one [128, 2] matmul.
        # (critic's relu(out) == h2 since ReLU is idempotent.)
        hd = jnp.dot(h2.astype(dot_dtype), wh,
                     preferred_element_type=jnp.float32) + bh   # [chunk, 2]

        # Epilogue: tanh only on the actor column, single full-width store.
        a_col = jnp.tanh(hd[:, 0:1]) * 2.0
        out_ref[pl.ds(r, chunk), :] = jnp.concatenate([a_col, hd[:, 1:2]],
                                                      axis=-1)

    if n_chunks == 1:
        process(0)
    else:
        def body(c, carry):
            process(pl.multiple_of(c * chunk, CHUNK))
            return carry
        lax.fori_loop(0, n_chunks, body, 0, unroll=True)


def _round_up(n, m):
    return ((n + m - 1) // m) * m


def ac_forward(x, params, *, batch_tile=2048, gridless_max=GRIDLESS_MAX):
    """Returns (action_mean [B,1], value [B,1])."""
    B = x.shape[0]
    w1, b1, w2, b2, wh, bh = params
    out_shape = jax.ShapeDtypeStruct((B, 2), jnp.float32)
    args = (x, w1, b1, w2, b2, wh, bh)

    if B <= gridless_max:
        # Tiny working set: no grid, everything resident in VMEM.
        vmem = pl.BlockSpec(memory_space=pltpu.MemorySpace.VMEM)
        heads = pl.pallas_call(
            ac_kernel,
            out_shape=out_shape,
            in_specs=[vmem] * 7,
            out_specs=vmem,
        )(*args)
    else:
        # Tiled path: >= 2 grid steps and an even step count (balanced across
        # v7x's two TensorCores); tile is a multiple of CHUNK so the inner
        # unrolled loop divides evenly. Weights stay resident (block (0,0)).
        num_tiles = max(2, 2 * pl.cdiv(pl.cdiv(B, batch_tile), 2))
        tb = _round_up(pl.cdiv(B, num_tiles), CHUNK)
        grid = (pl.cdiv(B, tb),)

        def resident(a):
            return pl.BlockSpec(a.shape, lambda i: (0, 0))

        heads = pl.pallas_call(
            ac_kernel,
            out_shape=out_shape,
            grid=grid,
            in_specs=[
                pl.BlockSpec((tb, STATUS_NUMS), lambda i: (i, 0)),
                resident(w1), resident(b1),
                resident(w2), resident(b2),
                resident(wh), resident(bh),
            ],
            out_specs=pl.BlockSpec((tb, 2), lambda i: (i, 0)),
            compiler_params=pltpu.CompilerParams(
                dimension_semantics=("parallel",)),
        )(*args)

    return heads[:, :ACTION_NUMS], heads[:, ACTION_NUMS:]


def xavier_uniform(key, fan_in, fan_out):
    # matches nn.init.xavier_uniform_ on a [out, in] weight; stored transposed
    # as [in, out] (same distribution, it's symmetric).
    limit = jnp.sqrt(6.0 / (fan_in + fan_out))
    return jax.random.uniform(key, (fan_in, fan_out), jnp.float32, -limit, limit)


def init_params(key, *, dot_dtype=jnp.bfloat16):
    """dot_dtype controls the storage dtype of the MXU operands (w2, wh).
    bf16 gives ~4-8x MXU throughput on the dominant 128x128 matmul; pass
    jnp.float32 for bit-faithful f32 math."""
    k = jax.random.split(key, 8)

    # PyTorch Linear default bias init: U(-1/sqrt(fan_in), 1/sqrt(fan_in))
    def bias(kk, fan_in, n):
        bound = 1.0 / jnp.sqrt(float(fan_in))
        return jax.random.uniform(kk, (1, n), jnp.float32, -bound, bound)

    w1 = xavier_uniform(k[0], STATUS_NUMS, HIDDEN)      # [3, 128]
    b1 = bias(k[1], STATUS_NUMS, HIDDEN)                # [1, 128]
    w2 = xavier_uniform(k[2], HIDDEN, HIDDEN)           # [128, 128]
    b2 = bias(k[3], HIDDEN, HIDDEN)                     # [1, 128]
    wa = xavier_uniform(k[4], HIDDEN, ACTION_NUMS)      # [128, 1]
    ba = bias(k[5], HIDDEN, ACTION_NUMS)                # [1, 1]
    wc = xavier_uniform(k[6], HIDDEN, 1)                # [128, 1]
    bc = bias(k[7], HIDDEN, 1)                          # [1, 1]

    # Fuse the two heads at init time: one [128, 2] weight and [1, 2] bias.
    wh = jnp.concatenate([wa, wc], axis=1)              # [128, 2]
    bh = jnp.concatenate([ba, bc], axis=1)              # [1, 2]
    # MXU operands in dot_dtype; layer-1 weight and all biases stay f32
    # (element-wise path is f32 everywhere, incl. v5e which has no bf16 VPU).
    return (w1, b1, w2.astype(dot_dtype), b2, wh.astype(dot_dtype), bh)


def ac_reference(x, params):
    """Mirrors the kernel math exactly (including bf16 casts on MXU operands)."""
    w1, b1, w2, b2, wh, bh = params
    dt = w2.dtype
    h1 = jnp.maximum(x @ w1 + b1, 0.0)
    h2 = jnp.maximum(
        jnp.dot(h1.astype(dt), w2, preferred_element_type=jnp.float32) + b2, 0.0)
    hd = jnp.dot(h2.astype(dt), wh, preferred_element_type=jnp.float32) + bh
    return jnp.tanh(hd[:, :1]) * 2.0, hd[:, 1:]


def ac_reference_f32(x, params):
    """Full-precision reference matching the original PyTorch module."""
    w1, b1, w2, b2, wh, bh = params
    w2 = w2.astype(jnp.float32)
    wh = wh.astype(jnp.float32)
    h = jnp.maximum(x @ w1 + b1, 0.0)
    h = jnp.maximum(h @ w2 + b2, 0.0)
    a = jnp.tanh(h @ wh[:, :1] + bh[:, :1]) * 2.0
    c = jnp.maximum(h, 0.0) @ wh[:, 1:] + bh[:, 1:]
    return a, c


if __name__ == "__main__":
    key = jax.random.PRNGKey(0)
    pkey, xkey, xkey2 = jax.random.split(key, 3)

    # --- f32 MXU operands, small batch: gridless path, strict check. ---
    params_f32 = init_params(pkey, dot_dtype=jnp.float32)
    B = 8
    x = jax.random.normal(xkey, (B, STATUS_NUMS), jnp.float32)
    action_mean, value = ac_forward(x, params_f32)
    jax.block_until_ready((action_mean, value))

    a_ref, c_ref = ac_reference_f32(x, params_f32)
    assert action_mean.shape == (B, ACTION_NUMS)
    assert value.shape == (B, 1)
    assert jnp.allclose(action_mean, a_ref, atol=1e-5, rtol=1e-5)
    assert jnp.allclose(value, c_ref, atol=1e-5, rtol=1e-5)

    # --- bf16 MXU operands, non-tile-divisible batch: tiled, batch-parallel
    #     grid path (2 tiles of 512 rows, last one partial). ---
    params = init_params(pkey)                      # bf16 w2 / wh (default)
    B2 = 520
    x2 = jax.random.normal(xkey2, (B2, STATUS_NUMS), jnp.float32)
    a2, c2 = ac_forward(x2, params)
    jax.block_until_ready((a2, c2))

    a2_ref, c2_ref = ac_reference(x2, params)       # same bf16 math
    a2_f32, c2_f32 = ac_reference_f32(x2, params)   # full-precision module
    assert a2.shape == (B2, ACTION_NUMS) and c2.shape == (B2, 1)
    assert jnp.allclose(a2, a2_ref, atol=2e-3, rtol=2e-3)
    assert jnp.allclose(c2, c2_ref, atol=2e-3, rtol=2e-3)
    assert jnp.allclose(a2, a2_f32, atol=5e-2, rtol=5e-2)
    assert jnp.allclose(c2, c2_f32, atol=5e-2, rtol=5e-2)

    print("KERNEL_OK")
</pallas_src>

<mosaic_0001>
module attributes {stable_mosaic.version = 11 : i64} {
  func.func @ac_kernel(%arg0: memref<8x3xf32, #tpu.memory_space<vmem>>, %arg1: memref<3x128xf32, #tpu.memory_space<vmem>>, %arg2: memref<1x128xf32, #tpu.memory_space<vmem>>, %arg3: memref<128x128xf32, #tpu.memory_space<vmem>>, %arg4: memref<1x128xf32, #tpu.memory_space<vmem>>, %arg5: memref<128x2xf32, #tpu.memory_space<vmem>>, %arg6: memref<1x2xf32, #tpu.memory_space<vmem>>, %arg7: memref<8x2xf32, #tpu.memory_space<vmem>>) attributes {dimension_semantics = [], scalar_prefetch = 0 : i64, scratch_operands = 0 : i64, tpu.core_type = #tpu.core_type<tc>} {
    %c0 = arith.constant 0 : index
    %c0_0 = arith.constant 0 : index
    %0 = vector.load %arg1[%c0, %c0_0] : memref<3x128xf32, #tpu.memory_space<vmem>>, vector<3x128xf32>
    %c0_1 = arith.constant 0 : index
    %c0_2 = arith.constant 0 : index
    %1 = vector.load %arg2[%c0_1, %c0_2] : memref<1x128xf32, #tpu.memory_space<vmem>>, vector<1x128xf32>
    %c0_3 = arith.constant 0 : index
    %c0_4 = arith.constant 0 : index
    %2 = vector.load %arg3[%c0_3, %c0_4] : memref<128x128xf32, #tpu.memory_space<vmem>>, vector<128x128xf32>
    %c0_5 = arith.constant 0 : index
    %c0_6 = arith.constant 0 : index
    %3 = vector.load %arg4[%c0_5, %c0_6] : memref<1x128xf32, #tpu.memory_space<vmem>>, vector<1x128xf32>
    %c0_7 = arith.constant 0 : index
    %c0_8 = arith.constant 0 : index
    %4 = vector.load %arg5[%c0_7, %c0_8] : memref<128x2xf32, #tpu.memory_space<vmem>>, vector<128x2xf32>
    %c0_9 = arith.constant 0 : index
    %c0_10 = arith.constant 0 : index
    %5 = vector.load %arg6[%c0_9, %c0_10] : memref<1x2xf32, #tpu.memory_space<vmem>>, vector<1x2xf32>
    %c0_11 = arith.constant 0 : index
    %c0_12 = arith.constant 0 : index
    %6 = vector.load %arg0[%c0_11, %c0_12] : memref<8x3xf32, #tpu.memory_space<vmem>>, vector<8x3xf32>
    %7 = vector.extract_strided_slice %6 {offsets = [0, 0], sizes = [8, 1], strides = [1, 1]} : vector<8x3xf32> to vector<8x1xf32>
    %8 = vector.extract_strided_slice %0 {offsets = [0, 0], sizes = [1, 128], strides = [1, 1]} : vector<3x128xf32> to vector<1x128xf32>
    %9 = vector.broadcast %7 : vector<8x1xf32> to vector<8x128xf32>
    %10 = vector.broadcast %8 : vector<1x128xf32> to vector<8x128xf32>
    %11 = arith.mulf %9, %10 : vector<8x128xf32>
    %12 = vector.extract_strided_slice %6 {offsets = [0, 1], sizes = [8, 1], strides = [1, 1]} : vector<8x3xf32> to vector<8x1xf32>
    %13 = vector.extract_strided_slice %0 {offsets = [1, 0], sizes = [1, 128], strides = [1, 1]} : vector<3x128xf32> to vector<1x128xf32>
    %14 = vector.broadcast %12 : vector<8x1xf32> to vector<8x128xf32>
    %15 = vector.broadcast %13 : vector<1x128xf32> to vector<8x128xf32>
    %16 = arith.mulf %14, %15 : vector<8x128xf32>
    %17 = arith.addf %11, %16 : vector<8x128xf32>
    %18 = vector.extract_strided_slice %6 {offsets = [0, 2], sizes = [8, 1], strides = [1, 1]} : vector<8x3xf32> to vector<8x1xf32>
    %19 = vector.extract_strided_slice %0 {offsets = [2, 0], sizes = [1, 128], strides = [1, 1]} : vector<3x128xf32> to vector<1x128xf32>
    %20 = vector.broadcast %18 : vector<8x1xf32> to vector<8x128xf32>
    %21 = vector.broadcast %19 : vector<1x128xf32> to vector<8x128xf32>
    %22 = arith.mulf %20, %21 : vector<8x128xf32>
    %23 = arith.addf %17, %22 : vector<8x128xf32>
    %24 = vector.broadcast %1 : vector<1x128xf32> to vector<8x128xf32>
    %25 = arith.addf %23, %24 : vector<8x128xf32>
    %cst = arith.constant 0.000000e+00 : f32
    %26 = vector.broadcast %cst : f32 to vector<8x128xf32>
    %27 = arith.maximumf %25, %26 : vector<8x128xf32>
    %cst_13 = arith.constant dense<0.000000e+00> : vector<8x128xf32>
    %28 = tpu.matmul %27, %2, %cst_13 {dimension_numbers = #tpu.dot_dimension_numbers<[1], [0], [0], [1], [0, 0, 1, 1], [], []>} : vector<8x128xf32>, vector<128x128xf32>, vector<8x128xf32> -> vector<8x128xf32>
    %29 = vector.broadcast %3 : vector<1x128xf32> to vector<8x128xf32>
    %30 = arith.addf %28, %29 : vector<8x128xf32>
    %cst_14 = arith.constant 0.000000e+00 : f32
    %31 = vector.broadcast %cst_14 : f32 to vector<8x128xf32>
    %32 = arith.maximumf %30, %31 : vector<8x128xf32>
    %cst_15 = arith.constant dense<0.000000e+00> : vector<8x2xf32>
    %33 = tpu.matmul %32, %4, %cst_15 {dimension_numbers = #tpu.dot_dimension_numbers<[1], [0], [0], [1], [0, 0, 1, 1], [], []>} : vector<8x128xf32>, vector<128x2xf32>, vector<8x2xf32> -> vector<8x2xf32>
    %34 = vector.broadcast %5 : vector<1x2xf32> to vector<8x2xf32>
    %35 = arith.addf %33, %34 : vector<8x2xf32>
    %36 = vector.extract_strided_slice %35 {offsets = [0, 0], sizes = [8, 1], strides = [1, 1]} : vector<8x2xf32> to vector<8x1xf32>
    %37 = math.tanh %36 : vector<8x1xf32>
    %cst_16 = arith.constant 2.000000e+00 : f32
    %38 = vector.broadcast %cst_16 : f32 to vector<8x1xf32>
    %39 = arith.mulf %37, %38 : vector<8x1xf32>
    %40 = vector.extract_strided_slice %35 {offsets = [0, 1], sizes = [8, 1], strides = [1, 1]} : vector<8x2xf32> to vector<8x1xf32>
    %41 = tpu.concatenate %39, %40 in 1 : vector<8x1xf32>, vector<8x1xf32> -> vector<8x2xf32>
    %c0_17 = arith.constant 0 : index
    %c0_18 = arith.constant 0 : index
    %42 = vector.load %arg7[%c0_17, %c0_18] : memref<8x2xf32, #tpu.memory_space<vmem>>, vector<8x2xf32>
    tpu.vector_store %arg7[%c0_17, %c0_18], %41 {strides = array<i32>} : memref<8x2xf32, #tpu.memory_space<vmem>>, vector<8x2xf32>,
    return
  }
}

</mosaic_0001>

<llo_original>
// kernel: tpu_custom_call.1
$region0: #{tpu_custom_call.1}
  #allocation0 [shape = 'u32[]', space=smem, size = 0x4, offset = 0x4, fixed_abs, tag = 'smem constant byte address 0x4 - core index']
  #allocation1 [shape = 'u32[144,128]{1,0:T(1,128)}', space=vmem, size = 0x12000, scoped, tag = 'internal scratch']
  %s0 = inlined_call_operand.vmem [shape: f32[8,3], index: 0, kind: input, shape index: {}]
  %s1 = inlined_call_operand.vmem [shape: f32[3,128], index: 1, kind: input, shape index: {}]
  %s2 = inlined_call_operand.vmem [shape: f32[1,128], index: 2, kind: input, shape index: {}]
  %s3 = inlined_call_operand.vmem [shape: f32[128,128], index: 3, kind: input, shape index: {}]
  %s4 = inlined_call_operand.vmem [shape: f32[1,128], index: 4, kind: input, shape index: {}]
  %s5 = inlined_call_operand.vmem [shape: f32[128,2], index: 5, kind: input, shape index: {}]
  %s6 = inlined_call_operand.vmem [shape: f32[1,2], index: 6, kind: input, shape index: {}]
  %s7 = inlined_call_operand.vmem [shape: f32[8,2], index: 7, kind: output, shape index: {}]
  %s8 = sld [smem:[#allocation0]]
  $region38: #{tpu_custom_call.1} parent=0
    _
  %s10 = ssub.s32 1, %s8
  %s11 = scalar_select 0, %s10, %s8
  // Predicated region
  $region2: #{tpu_custom_call.1} parent=0 // pred_check
    _
  $region3: #{tpu_custom_call.1} parent=0 // pred_check_branch
    %13 = sbr.rel (0) target = $region5
  $region4: #{tpu_custom_call.1} parent=0 // pred_region
    _
  $region5: #{tpu_custom_call.1} parent=0 // pred_fallthru
    _
  // Predicated region
  $region6: #{tpu_custom_call.1} parent=0 // pred_check
    _
  $region7: #{tpu_custom_call.1} parent=0 // pred_check_branch
    %15 = sbr.rel (0) target = $region9
  $region8: #{tpu_custom_call.1} parent=0 // pred_region
    _
  $region9: #{tpu_custom_call.1} parent=0 // pred_fallthru
    _
  // Predicated region
  $region10: #{tpu_custom_call.1} parent=0 // pred_check
    _
  $region11: #{tpu_custom_call.1} parent=0 // pred_check_branch
    %17 = sbr.rel (0) target = $region13
  $region12: #{tpu_custom_call.1} parent=0 // pred_region
    _
  $region13: #{tpu_custom_call.1} parent=0 // pred_fallthru
    _
  // Predicated region
  $region14: #{tpu_custom_call.1} parent=0 // pred_check
    _
  $region15: #{tpu_custom_call.1} parent=0 // pred_check_branch
    %19 = sbr.rel (0) target = $region17
  $region16: #{tpu_custom_call.1} parent=0 // pred_region
    _
  $region17: #{tpu_custom_call.1} parent=0 // pred_fallthru
    _
  // Predicated region
  $region18: #{tpu_custom_call.1} parent=0 // pred_check
    _
  $region19: #{tpu_custom_call.1} parent=0 // pred_check_branch
    %21 = sbr.rel (0) target = $region21
  $region20: #{tpu_custom_call.1} parent=0 // pred_region
    _
  $region21: #{tpu_custom_call.1} parent=0 // pred_fallthru
    _
  // Predicated region
  $region22: #{tpu_custom_call.1} parent=0 // pred_check
    _
  $region23: #{tpu_custom_call.1} parent=0 // pred_check_branch
    %23 = sbr.rel (0) target = $region25
  $region24: #{tpu_custom_call.1} parent=0 // pred_region
    _
  $region25: #{tpu_custom_call.1} parent=0 // pred_fallthru
    _
  // Predicated region
  $region26: #{tpu_custom_call.1} parent=0 // pred_check
    _
  $region27: #{tpu_custom_call.1} parent=0 // pred_check_branch
    %25 = sbr.rel (0) target = $region29
  $region28: #{tpu_custom_call.1} parent=0 // pred_region
    _
  $region29: #{tpu_custom_call.1} parent=0 // pred_fallthru
    _
  %v26 = vld [vmem:[%s1] sm:$0x7]
  %v27 = vld [vmem:[%s2] sm:$0x1]
  %v28 = vld [vmem:[%s3] sm:$0xff]
  %v29 = vld [vmem:[%s3 + $0x8] sm:$0xff]
  %v30 = vld [vmem:[%s3 + $0x10] sm:$0xff]
  %v31 = vld [vmem:[%s3 + $0x18] sm:$0xff]
  %v32 = vld [vmem:[%s3 + $0x20] sm:$0xff]
  %v33 = vld [vmem:[%s3 + $0x28] sm:$0xff]
  %v34 = vld [vmem:[%s3 + $0x30] sm:$0xff]
  %v35 = vld [vmem:[%s3 + $0x38] sm:$0xff]
  %v36 = vld [vmem:[%s3 + $0x40] sm:$0xff]
  %v37 = vld [vmem:[%s3 + $0x48] sm:$0xff]
  %v38 = vld [vmem:[%s3 + $0x50] sm:$0xff]
  %v39 = vld [vmem:[%s3 + $0x58] sm:$0xff]
  %v40 = vld [vmem:[%s3 + $0x60] sm:$0xff]
  %v41 = vld [vmem:[%s3 + $0x68] sm:$0xff]
  %v42 = vld [vmem:[%s3 + $0x70] sm:$0xff]
  %v43 = vld [vmem:[%s3 + $0x78] sm:$0xff]
  %v44 = vld [vmem:[%s4] sm:$0x1]
  %v45 = vld [vmem:[%s5] sm:$0xff]
  %v46 = vld [vmem:[%s5 + $0x8] sm:$0xff]
  %v47 = vld [vmem:[%s5 + $0x10] sm:$0xff]
  %v48 = vld [vmem:[%s5 + $0x18] sm:$0xff]
  %v49 = vld [vmem:[%s5 + $0x20] sm:$0xff]
  %v50 = vld [vmem:[%s5 + $0x28] sm:$0xff]
  %v51 = vld [vmem:[%s5 + $0x30] sm:$0xff]
  %v52 = vld [vmem:[%s5 + $0x38] sm:$0xff]
  %v53 = vld [vmem:[%s5 + $0x40] sm:$0xff]
  %v54 = vld [vmem:[%s5 + $0x48] sm:$0xff]
  %v55 = vld [vmem:[%s5 + $0x50] sm:$0xff]
  %v56 = vld [vmem:[%s5 + $0x58] sm:$0xff]
  %v57 = vld [vmem:[%s5 + $0x60] sm:$0xff]
  %v58 = vld [vmem:[%s5 + $0x68] sm:$0xff]
  %v59 = vld [vmem:[%s5 + $0x70] sm:$0xff]
  %v60 = vld [vmem:[%s5 + $0x78] sm:$0xff]
  %v61 = vld [vmem:[%s6] sm:$0x1]
  %v62 = vld [vmem:[%s0] sm:$0xff]
  %64 = vset.pattern.permute.xlu0 0
  %65 = vperm.xlu0 %64, %v62
  %v66 = vpop.permute.xlu0 %65
  %v68 = vlaneseq
  %v69 = vshrl.u32 %v68, 7
  %v70 = vsub.s32 0, %v69
  %v71 = vrot.slane %v26, %v70
  %v72 = vmul.f32 %v66, %v71
  %73 = vset.pattern.permute.xlu0 1
  %74 = vperm.xlu0 %73, %v62
  %v75 = vpop.permute.xlu0 %74
  %v77 = vlaneseq
  %v78 = vshrl.u32 %v77, 7
  %v79 = vsub.s32 1, %v78
  %v80 = vrot.slane %v26, %v79
  %v81 = vmul.f32 %v75, %v80
  %v82 = vadd.f32 %v72, %v81
  %83 = vset.pattern.permute.xlu0 2
  %84 = vperm.xlu0 %83, %v62
  %v85 = vpop.permute.xlu0 %84
  %v87 = vlaneseq
  %v88 = vshrl.u32 %v87, 7
  %v89 = vsub.s32 2, %v88
  %v90 = vrot.slane %v26, %v89
  %v91 = vmul.f32 %v85, %v90
  %v92 = vadd.f32 %v82, %v91
  %v94 = vlaneseq
  %v95 = vshrl.u32 %v94, 7
  %v96 = vsub.s32 0, %v95
  %v97 = vrot.slane %v27, %v96
  %v99 = vadd.f32 %v92, %v97
  %v100 = vmax.f32 %v99, 0.0
  %v102 = vlaneseq
  %v103 = vshrl.u32 %v102, 7
  %v104 = vsub.s32 0, %v103
  %v105 = vrot.slane %v44, %v104
  %107 = vmatprep.subr.mxu0 0.0
  %108 = vmatpush1.msra.mxu0 %v28
  %109 = vmatprep.subr.mxu0 0.0
  %110 = vmatpush1.msra.mxu0 %v29
  %111 = vmatprep.subr.mxu0 0.0
  %112 = vmatpush1.msra.mxu0 %v30
  %113 = vmatprep.subr.mxu0 0.0
  %114 = vmatpush1.msra.mxu0 %v31
  %115 = vmatprep.subr.mxu0 0.0
  %116 = vmatpush1.msra.mxu0 %v32
  %117 = vmatprep.subr.mxu0 0.0
  %118 = vmatpush1.msra.mxu0 %v33
  %119 = vmatprep.subr.mxu0 0.0
  %120 = vmatpush1.msra.mxu0 %v34
  %121 = vmatprep.subr.mxu0 0.0
  %122 = vmatpush1.msra.mxu0 %v35
  %123 = vmatprep.subr.mxu0 0.0
  %124 = vmatpush1.msra.mxu0 %v36
  %125 = vmatprep.subr.mxu0 0.0
  %126 = vmatpush1.msra.mxu0 %v37
  %127 = vmatprep.subr.mxu0 0.0
  %128 = vmatpush1.msra.mxu0 %v38
  %129 = vmatprep.subr.mxu0 0.0
  %130 = vmatpush1.msra.mxu0 %v39
  %131 = vmatprep.subr.mxu0 0.0
  %132 = vmatpush1.msra.mxu0 %v40
  %133 = vmatprep.subr.mxu0 0.0
  %134 = vmatpush1.msra.mxu0 %v41
  %135 = vmatprep.subr.mxu0 0.0
  %136 = vmatpush1.msra.mxu0 %v42
  %137 = vmatprep.subr.mxu0 0.0
  %138 = vmatpush1.msra.mxu0 %v43
  %139 = vmatprep.subr.mxu0 0.0
  %140 = vmatpush1.msra.mxu0 0.0
  %141 = vmatprep.subr.mxu0 0.0
  %142 = vmatpush1.msra.mxu0 0.0
  %143 = vmatprep.subr.mxu0 0.0
  %144 = vmatpush1.msra.mxu0 0.0
  %145 = vmatprep.subr.mxu0 0.0
  %146 = vmatpush1.msra.mxu0 0.0
  %147 = vmatprep.subr.mxu0 0.0
  %148 = vmatpush1.msra.mxu0 0.0
  %149 = vmatprep.subr.mxu0 0.0
  %150 = vmatpush1.msra.mxu0 0.0
  %151 = vmatprep.subr.mxu0 0.0
  %152 = vmatpush1.msra.mxu0 0.0
  %153 = vmatprep.subr.mxu0 0.0
  %154 = vmatpush1.msra.mxu0 0.0
  %155 = vmatprep.subr.mxu0 0.0
  %156 = vmatpush1.msra.mxu0 0.0
  %157 = vmatprep.subr.mxu0 0.0
  %158 = vmatpush1.msra.mxu0 0.0
  %159 = vmatprep.subr.mxu0 0.0
  %160 = vmatpush1.msra.mxu0 0.0
  %161 = vmatprep.subr.mxu0 0.0
  %162 = vmatpush1.msra.mxu0 0.0
  %163 = vmatprep.subr.mxu0 0.0
  %164 = vmatpush1.msra.mxu0 0.0
  %165 = vmatprep.subr.mxu0 0.0
  %166 = vmatpush1.msra.mxu0 0.0
  %167 = vmatprep.subr.mxu0 0.0
  %168 = vmatpush1.msra.mxu0 0.0
  %169 = vmatprep.subr.mxu0 0.0
  %170 = vmatpush1.msra.mxu0 0.0
  %171 = vmatprep.mubr.f32.mxu0 0.0
  %172 = vmatmul.mubr.f32.gmra.mrb[0].mxu0 %v100
  %v173 = vpop.f32.mrb[0].mxu0
  %v174 = vadd.f32 %v105, %v173
  %v175 = vpop.f32.mrb[0].mxu0
  %176 = vdwg.mxu0
  %v177 = vmax.f32 %v174, 0.0
  %v179 = vlaneseq
  %v180 = vshrl.u32 %v179, 7
  %v181 = vsub.s32 0, %v180
  %v182 = vrot.slane %v61, %v181
  %184 = vmatprep.subr.mxu0 0.0
  %185 = vmatpush1.msra.mxu0 %v45
  %186 = vmatprep.subr.mxu0 0.0
  %187 = vmatpush1.msra.mxu0 %v46
  %188 = vmatprep.subr.mxu0 0.0
  %189 = vmatpush1.msra.mxu0 %v47
  %190 = vmatprep.subr.mxu0 0.0
  %191 = vmatpush1.msra.mxu0 %v48
  %192 = vmatprep.subr.mxu0 0.0
  %193 = vmatpush1.msra.mxu0 %v49
  %194 = vmatprep.subr.mxu0 0.0
  %195 = vmatpush1.msra.mxu0 %v50
  %196 = vmatprep.subr.mxu0 0.0
  %197 = vmatpush1.msra.mxu0 %v51
  %198 = vmatprep.subr.mxu0 0.0
  %199 = vmatpush1.msra.mxu0 %v52
  %200 = vmatprep.subr.mxu0 0.0
  %201 = vmatpush1.msra.mxu0 %v53
  %202 = vmatprep.subr.mxu0 0.0
  %203 = vmatpush1.msra.mxu0 %v54
  %204 = vmatprep.subr.mxu0 0.0
  %205 = vmatpush1.msra.mxu0 %v55
  %206 = vmatprep.subr.mxu0 0.0
  %207 = vmatpush1.msra.mxu0 %v56
  %208 = vmatprep.subr.mxu0 0.0
  %209 = vmatpush1.msra.mxu0 %v57
  %210 = vmatprep.subr.mxu0 0.0
  %211 = vmatpush1.msra.mxu0 %v58
  %212 = vmatprep.subr.mxu0 0.0
  %213 = vmatpush1.msra.mxu0 %v59
  %214 = vmatprep.subr.mxu0 0.0
  %215 = vmatpush1.msra.mxu0 %v60
  %216 = vmatprep.subr.mxu0 0.0
  %217 = vmatpush1.msra.mxu0 0.0
  %218 = vmatprep.subr.mxu0 0.0
  %219 = vmatpush1.msra.mxu0 0.0
  %220 = vmatprep.subr.mxu0 0.0
  %221 = vmatpush1.msra.mxu0 0.0
  %222 = vmatprep.subr.mxu0 0.0
  %223 = vmatpush1.msra.mxu0 0.0
  %224 = vmatprep.subr.mxu0 0.0
  %225 = vmatpush1.msra.mxu0 0.0
  %226 = vmatprep.subr.mxu0 0.0
  %227 = vmatpush1.msra.mxu0 0.0
  %228 = vmatprep.subr.mxu0 0.0
  %229 = vmatpush1.msra.mxu0 0.0
  %230 = vmatprep.subr.mxu0 0.0
  %231 = vmatpush1.msra.mxu0 0.0
  %232 = vmatprep.subr.mxu0 0.0
  %233 = vmatpush1.msra.mxu0 0.0
  %234 = vmatprep.subr.mxu0 0.0
  %235 = vmatpush1.msra.mxu0 0.0
  %236 = vmatprep.subr.mxu0 0.0
  %237 = vmatpush1.msra.mxu0 0.0
  %238 = vmatprep.subr.mxu0 0.0
  %239 = vmatpush1.msra.mxu0 0.0
  %240 = vmatprep.subr.mxu0 0.0
  %241 = vmatpush1.msra.mxu0 0.0
  %242 = vmatprep.subr.mxu0 0.0
  %243 = vmatpush1.msra.mxu0 0.0
  %244 = vmatprep.subr.mxu0 0.0
  %245 = vmatpush1.msra.mxu0 0.0
  %246 = vmatprep.subr.mxu0 0.0
  %247 = vmatpush1.msra.mxu0 0.0
  %248 = vmatprep.mubr.f32.mxu0 0.0
  %249 = vmatmul.mubr.f32.gmra.mrb[0].mxu0 %v177
  %v250 = vpop.f32.mrb[0].mxu0
  %v251 = vadd.f32 %v182, %v250
  %v252 = vpop.f32.mrb[0].mxu0
  %253 = vdwg.mxu0
  %v254 = vtanh.pop %v251
  %v255 = vmul.f32 %v254, 2.0
  %vm256 = vcmask 7168
  %v257 = vsel %vm256, %v255, %v251
  %vm258 = vcmask 15360
  %259 = vst.msk [vmem:[%s7] sm:$0xff] %vm258, %v257
  // Predicated region
  $region30: #{tpu_custom_call.1} parent=0 // pred_check
    _
  $region31: #{tpu_custom_call.1} parent=0 // pred_check_branch
    %261 = sbr.rel (0) target = $region33
  $region32: #{tpu_custom_call.1} parent=0 // pred_region
    _
  $region33: #{tpu_custom_call.1} parent=0 // pred_fallthru
    _
  // Predicated region
  $region34: #{tpu_custom_call.1} parent=0 // pred_check
    _
  $region35: #{tpu_custom_call.1} parent=0 // pred_check_branch
    %263 = sbr.rel (0) target = $region37
  $region36: #{tpu_custom_call.1} parent=0 // pred_region
    _
  $region37: #{tpu_custom_call.1} parent=0 // pred_fallthru
    _

</llo_original>
